<compile_context>
chip_gen: v5e
topology: v5e:2x2
jax: 0.10.0
libtpu: 0.0.40
codegen_flags: <defaults>
</compile_context>

<pallas_src>
import functools

import jax
import jax.numpy as jnp
from jax.experimental import pallas as pl
from jax.experimental.pallas import tpu as pltpu


KH = KW = 3  # Conv2d(..., kernel_size=3)


def _round_up(x, m):
    return (x + m - 1) // m * m


# ---------------------------------------------------------------------------
# Pallas kernel: fused 3x3 VALID conv + (bias - 203) + ReLU as ONE MXU matmul
# ---------------------------------------------------------------------------
def _conv_stack_kernel(x_ref, w_ref, b_ref, o_ref, xs_ref, *, W, cpad):
    # x_ref : (cpad, H*W)     f32  channel-padded concat(x1, x2), flat NCHW (N=1)
    # w_ref : (Cout, 9*cpad)  bf16 packed weights; tap t lives in cols [t*cpad, (t+1)*cpad)
    # b_ref : (Cout, 1)       f32  conv bias with the "- 203" folded in
    # o_ref : (Cout, H*W)     f32  full-grid conv result; valid window = [:, :Hout, :Wout]
    # xs_ref: (9*cpad, H*W)   bf16 scratch holding the 9 lane-shifted input copies
    x = x_ref[...]
    hw = x.shape[-1]
    for di in range(KH):
        for dj in range(KW):
            t = di * KW + dj
            s = di * W + dj                      # flat lane shift for tap (di, dj)
            # Left-shift by s (wrap only pollutes lanes outside the valid window).
            xs = x if s == 0 else pltpu.roll(x, shift=hw - s, axis=1)
            # 16-sublane-aligned store (cpad is a multiple of 16): unmasked stores.
            xs_ref[t * cpad:(t + 1) * cpad, :] = xs.astype(xs_ref.dtype)
    # One big MXU contraction, K = 9*cpad; zero-padded channels contribute 0.
    acc = jnp.dot(w_ref[...], xs_ref[...], preferred_element_type=jnp.float32)
    # Bias already includes the -203; epilogue is one add + ReLU, lane-dense store.
    o_ref[...] = jnp.maximum(acc + b_ref[...], 0.0)


# ---------------------------------------------------------------------------
# Hoisted parameter transforms (done once, outside the per-call hot path)
# ---------------------------------------------------------------------------
def prepare_params(weight, bias):
    cout, cin, kh, kw = weight.shape
    assert (kh, kw) == (KH, KW)
    cpad = _round_up(cin, 16)  # 16-sublane alignment for the bf16 scratch stores
    # (Cout, Cin, kh, kw) -> (kh*kw, Cout, Cin), zero-pad channels, pack taps on lanes.
    w_taps = jnp.transpose(weight, (2, 3, 0, 1)).reshape(kh * kw, cout, cin)
    w_taps = jnp.pad(w_taps, ((0, 0), (0, 0), (0, cpad - cin)))
    w_all = jnp.transpose(w_taps, (1, 0, 2)).reshape(cout, kh * kw * cpad)
    w_all = w_all.astype(jnp.bfloat16)                       # single (32, 288) bf16 slab
    b_adj = (bias - 203.0).reshape(cout, 1).astype(jnp.float32)  # fold the -203 once
    return w_all, b_adj


# ---------------------------------------------------------------------------
# Kernel wrapper: relu(conv2d(cat(x1, x2)) + bias - 203), valid window only
# ---------------------------------------------------------------------------
@jax.jit
def fused_conv_sub_relu(x1, x2, w_all, b_adj):
    N, C1, H, W = x1.shape
    C2 = x2.shape[1]
    cin = C1 + C2
    cpad = _round_up(cin, 16)
    cout = b_adj.shape[0]
    hout, wout = H - KH + 1, W - KW + 1
    hw = H * W
    assert N == 1  # TODO(synk): N > 1 would need a batch grid axis; the spec uses N = 1.

    # NCHW with N=1 flattens to (C, H*W) with zero-cost reshapes; the channel concat
    # + pad to 32 rows is a tiny one-time copy (not worth avoiding at this size).
    x = jnp.concatenate([x1.reshape(C1, hw), x2.reshape(C2, hw)], axis=0)
    x = jnp.pad(x, ((0, cpad - cin), (0, 0))).astype(jnp.float32)      # (32, H*W)

    kernel = functools.partial(_conv_stack_kernel, W=W, cpad=cpad)
    bytes_accessed = x.size * 4 + w_all.size * 2 + b_adj.size * 4 + cout * hw * 4
    out_full = pl.pallas_call(
        kernel,
        out_shape=jax.ShapeDtypeStruct((cout, hw), jnp.float32),
        in_specs=[pl.BlockSpec(memory_space=pltpu.MemorySpace.VMEM)] * 3,
        out_specs=pl.BlockSpec(memory_space=pltpu.MemorySpace.VMEM),
        scratch_shapes=[pltpu.VMEM((KH * KW * cpad, hw), jnp.bfloat16)],
        cost_estimate=pl.CostEstimate(
            flops=2 * cout * KH * KW * cin * hw,
            bytes_accessed=bytes_accessed,
            transcendentals=0,
        ),
    )(x, w_all, b_adj)                                                  # (Cout, H*W)

    # Only the top-left (hout, wout) window is valid (roll wrap lands in the tail).
    return out_full.reshape(cout, H, W)[:, :hout, :wout][None]          # (1, 32, 14, 14)


# ---------------------------------------------------------------------------
# Model.forward semantics: the conv chain is dead w.r.t. the returned value, so
# XLA dead-code-eliminates the pallas_call here (per review, the biggest win).
# ---------------------------------------------------------------------------
@jax.jit
def model_forward(x1, x2, w_all, b_adj):
    _ = fused_conv_sub_relu(x1, x2, w_all, b_adj)   # v1..v4 (unused by the module)
    return jnp.zeros_like(x1)                        # t


# ---------------------------------------------------------------------------
if __name__ == "__main__":
    key = jax.random.PRNGKey(0)
    k1, k2, kw_, kb_ = jax.random.split(key, 4)

    N, H, W = 1, 16, 16
    C1, C2 = 3, 23
    Cin, Cout = C1 + C2, 32

    x1 = jax.random.normal(k1, (N, C1, H, W), dtype=jnp.float32)
    x2 = jax.random.normal(k2, (N, C2, H, W), dtype=jnp.float32)

    # TODO(synk): the original module declares Conv2d(in_channels=3, ...) but feeds it the
    # 26-channel concat (would raise in PyTorch); weights are built with in_channels = 26
    # so the conv path is executable.  Bias is offset by +203 so relu(conv - 203) has a
    # mix of zero and non-zero outputs, making the check meaningful.
    fan_in = Cin * KH * KW
    bound = 1.0 / (fan_in ** 0.5)
    weight = jax.random.uniform(kw_, (Cout, Cin, KH, KW), jnp.float32, -bound, bound)
    bias = jax.random.uniform(kb_, (Cout,), jnp.float32, -bound, bound) + 203.0

    w_all, b_adj = prepare_params(weight, bias)

    t = model_forward(x1, x2, w_all, b_adj)            # module's semantic output
    v4 = fused_conv_sub_relu(x1, x2, w_all, b_adj)     # kernel path (verification)
    jax.block_until_ready(t)
    jax.block_until_ready(v4)

    # Reference: f32 XLA conv on the concatenated input, then -203 and ReLU.
    v1 = jnp.concatenate((x1, x2), axis=1)
    ref = jax.lax.conv_general_dilated(
        v1, weight, window_strides=(1, 1), padding="VALID",
        dimension_numbers=("NCHW", "OIHW", "NCHW"),
        precision=jax.lax.Precision.HIGHEST,
    ) + bias.reshape(1, Cout, 1, 1)
    ref = jnp.maximum(ref - 203.0, 0.0)

    assert v4.shape == ref.shape, (v4.shape, ref.shape)
    # bf16 MXU operands with an f32 accumulator -> bf16-level tolerance vs f32 reference.
    assert jnp.allclose(v4, ref, atol=3e-2, rtol=3e-2), (
        "conv path mismatch", float(jnp.max(jnp.abs(v4 - ref))))
    assert bool(jnp.any(v4 > 0)), "degenerate test: all ReLU outputs are zero"
    assert t.shape == x1.shape and bool(jnp.all(t == 0)), "zeros output mismatch"

    print("KERNEL_OK")
</pallas_src>

<mosaic_0001>
module attributes {stable_mosaic.version = 11 : i64} {
  func.func @_conv_stack_kernel(%arg0: memref<32x256xf32, #tpu.memory_space<vmem>>, %arg1: memref<32x288xbf16, #tpu.memory_space<vmem>>, %arg2: memref<32x1xf32, #tpu.memory_space<vmem>>, %arg3: memref<32x256xf32, #tpu.memory_space<vmem>>, %arg4: memref<288x256xbf16, #tpu.memory_space<vmem>>) attributes {dimension_semantics = [], scalar_prefetch = 0 : i64, scratch_operands = 1 : i64, tpu.core_type = #tpu.core_type<tc>} {
    %c0 = arith.constant 0 : index
    %c0_0 = arith.constant 0 : index
    %0 = vector.load %arg0[%c0, %c0_0] : memref<32x256xf32, #tpu.memory_space<vmem>>, vector<32x256xf32>
    %1 = arith.truncf %0 : vector<32x256xf32> to vector<32x256xbf16>
    %c0_1 = arith.constant 0 : index
    %c0_2 = arith.constant 0 : index
    %2 = vector.load %arg4[%c0_1, %c0_2] : memref<288x256xbf16, #tpu.memory_space<vmem>>, vector<32x256xbf16>
    tpu.vector_store %arg4[%c0_1, %c0_2], %1 {strides = array<i32>} : memref<288x256xbf16, #tpu.memory_space<vmem>>, vector<32x256xbf16>,
    %c255_i32 = arith.constant 255 : i32
    %3 = tpu.dynamic_rotate %0 by %c255_i32 dim 1 : vector<32x256xf32>, i32 -> vector<32x256xf32>
    %4 = arith.truncf %3 : vector<32x256xf32> to vector<32x256xbf16>
    %c32 = arith.constant 32 : index
    %c0_3 = arith.constant 0 : index
    %5 = vector.load %arg4[%c32, %c0_3] : memref<288x256xbf16, #tpu.memory_space<vmem>>, vector<32x256xbf16>
    tpu.vector_store %arg4[%c32, %c0_3], %4 {strides = array<i32>} : memref<288x256xbf16, #tpu.memory_space<vmem>>, vector<32x256xbf16>,
    %c254_i32 = arith.constant 254 : i32
    %6 = tpu.dynamic_rotate %0 by %c254_i32 dim 1 : vector<32x256xf32>, i32 -> vector<32x256xf32>
    %7 = arith.truncf %6 : vector<32x256xf32> to vector<32x256xbf16>
    %c64 = arith.constant 64 : index
    %c0_4 = arith.constant 0 : index
    %8 = vector.load %arg4[%c64, %c0_4] : memref<288x256xbf16, #tpu.memory_space<vmem>>, vector<32x256xbf16>
    tpu.vector_store %arg4[%c64, %c0_4], %7 {strides = array<i32>} : memref<288x256xbf16, #tpu.memory_space<vmem>>, vector<32x256xbf16>,
    %c240_i32 = arith.constant 240 : i32
    %9 = tpu.dynamic_rotate %0 by %c240_i32 dim 1 : vector<32x256xf32>, i32 -> vector<32x256xf32>
    %10 = arith.truncf %9 : vector<32x256xf32> to vector<32x256xbf16>
    %c96 = arith.constant 96 : index
    %c0_5 = arith.constant 0 : index
    %11 = vector.load %arg4[%c96, %c0_5] : memref<288x256xbf16, #tpu.memory_space<vmem>>, vector<32x256xbf16>
    tpu.vector_store %arg4[%c96, %c0_5], %10 {strides = array<i32>} : memref<288x256xbf16, #tpu.memory_space<vmem>>, vector<32x256xbf16>,
    %c239_i32 = arith.constant 239 : i32
    %12 = tpu.dynamic_rotate %0 by %c239_i32 dim 1 : vector<32x256xf32>, i32 -> vector<32x256xf32>
    %13 = arith.truncf %12 : vector<32x256xf32> to vector<32x256xbf16>
    %c128 = arith.constant 128 : index
    %c0_6 = arith.constant 0 : index
    %14 = vector.load %arg4[%c128, %c0_6] : memref<288x256xbf16, #tpu.memory_space<vmem>>, vector<32x256xbf16>
    tpu.vector_store %arg4[%c128, %c0_6], %13 {strides = array<i32>} : memref<288x256xbf16, #tpu.memory_space<vmem>>, vector<32x256xbf16>,
    %c238_i32 = arith.constant 238 : i32
    %15 = tpu.dynamic_rotate %0 by %c238_i32 dim 1 : vector<32x256xf32>, i32 -> vector<32x256xf32>
    %16 = arith.truncf %15 : vector<32x256xf32> to vector<32x256xbf16>
    %c160 = arith.constant 160 : index
    %c0_7 = arith.constant 0 : index
    %17 = vector.load %arg4[%c160, %c0_7] : memref<288x256xbf16, #tpu.memory_space<vmem>>, vector<32x256xbf16>
    tpu.vector_store %arg4[%c160, %c0_7], %16 {strides = array<i32>} : memref<288x256xbf16, #tpu.memory_space<vmem>>, vector<32x256xbf16>,
    %c224_i32 = arith.constant 224 : i32
    %18 = tpu.dynamic_rotate %0 by %c224_i32 dim 1 : vector<32x256xf32>, i32 -> vector<32x256xf32>
    %19 = arith.truncf %18 : vector<32x256xf32> to vector<32x256xbf16>
    %c192 = arith.constant 192 : index
    %c0_8 = arith.constant 0 : index
    %20 = vector.load %arg4[%c192, %c0_8] : memref<288x256xbf16, #tpu.memory_space<vmem>>, vector<32x256xbf16>
    tpu.vector_store %arg4[%c192, %c0_8], %19 {strides = array<i32>} : memref<288x256xbf16, #tpu.memory_space<vmem>>, vector<32x256xbf16>,
    %c223_i32 = arith.constant 223 : i32
    %21 = tpu.dynamic_rotate %0 by %c223_i32 dim 1 : vector<32x256xf32>, i32 -> vector<32x256xf32>
    %22 = arith.truncf %21 : vector<32x256xf32> to vector<32x256xbf16>
    %c224 = arith.constant 224 : index
    %c0_9 = arith.constant 0 : index
    %23 = vector.load %arg4[%c224, %c0_9] : memref<288x256xbf16, #tpu.memory_space<vmem>>, vector<32x256xbf16>
    tpu.vector_store %arg4[%c224, %c0_9], %22 {strides = array<i32>} : memref<288x256xbf16, #tpu.memory_space<vmem>>, vector<32x256xbf16>,
    %c222_i32 = arith.constant 222 : i32
    %24 = tpu.dynamic_rotate %0 by %c222_i32 dim 1 : vector<32x256xf32>, i32 -> vector<32x256xf32>
    %25 = arith.truncf %24 : vector<32x256xf32> to vector<32x256xbf16>
    %c256 = arith.constant 256 : index
    %c0_10 = arith.constant 0 : index
    %26 = vector.load %arg4[%c256, %c0_10] : memref<288x256xbf16, #tpu.memory_space<vmem>>, vector<32x256xbf16>
    tpu.vector_store %arg4[%c256, %c0_10], %25 {strides = array<i32>} : memref<288x256xbf16, #tpu.memory_space<vmem>>, vector<32x256xbf16>,
    %c0_11 = arith.constant 0 : index
    %c0_12 = arith.constant 0 : index
    %27 = vector.load %arg1[%c0_11, %c0_12] : memref<32x288xbf16, #tpu.memory_space<vmem>>, vector<32x288xbf16>
    %c0_13 = arith.constant 0 : index
    %c0_14 = arith.constant 0 : index
    %28 = vector.load %arg4[%c0_13, %c0_14] : memref<288x256xbf16, #tpu.memory_space<vmem>>, vector<288x256xbf16>
    %cst = arith.constant dense<0.000000e+00> : vector<32x256xf32>
    %29 = tpu.matmul %27, %28, %cst {dimension_numbers = #tpu.dot_dimension_numbers<[1], [0], [0], [1], [0, 0, 1, 1], [], []>} : vector<32x288xbf16>, vector<288x256xbf16>, vector<32x256xf32> -> vector<32x256xf32>
    %c0_15 = arith.constant 0 : index
    %c0_16 = arith.constant 0 : index
    %30 = vector.load %arg2[%c0_15, %c0_16] : memref<32x1xf32, #tpu.memory_space<vmem>>, vector<32x1xf32>
    %31 = vector.broadcast %30 : vector<32x1xf32> to vector<32x256xf32>
    %32 = arith.addf %29, %31 : vector<32x256xf32>
    %cst_17 = arith.constant 0.000000e+00 : f32
    %33 = vector.broadcast %cst_17 : f32 to vector<32x256xf32>
    %34 = arith.maximumf %32, %33 : vector<32x256xf32>
    %c0_18 = arith.constant 0 : index
    %c0_19 = arith.constant 0 : index
    %35 = vector.load %arg3[%c0_18, %c0_19] : memref<32x256xf32, #tpu.memory_space<vmem>>, vector<32x256xf32>
    tpu.vector_store %arg3[%c0_18, %c0_19], %34 {strides = array<i32>} : memref<32x256xf32, #tpu.memory_space<vmem>>, vector<32x256xf32>,
    return
  }
}

</mosaic_0001>

<llo_original>
// kernel: fused_conv_sub_relu.1
$region0: #{fused_conv_sub_relu.1}
  #allocation0 [shape = 'u32[]', space=smem, size = 0x4, offset = 0x4, fixed_abs, tag = 'smem constant byte address 0x4 - core index']
  #allocation1 [shape = 'u32[72,128]{1,0:T(1,128)}', space=vmem, size = 0x9000, scoped, tag = 'internal scratch']
  #allocation2 [shape = 'bf16[288,256]{1,0:T(8,128)(2,1)}', space=vmem, size = 0x24000, scoped, tag = 'scratch operand']
  %s0 = inlined_call_operand.vmem [shape: f32[32,256], index: 0, kind: input, shape index: {}]
  %s1 = inlined_call_operand.vmem [shape: bf16[32,288], index: 1, kind: input, shape index: {}]
  %s2 = inlined_call_operand.vmem [shape: f32[32,1], index: 2, kind: input, shape index: {}]
  %s3 = inlined_call_operand.vmem [shape: f32[32,256], index: 3, kind: output, shape index: {}]
  %s4 = sld [smem:[#allocation0]]
  $region22: #{fused_conv_sub_relu.1} parent=0
    _
  %s6 = ssub.s32 1, %s4
  %s7 = scalar_select 0, %s6, %s4
  // Predicated region
  $region2: #{fused_conv_sub_relu.1} parent=0 // pred_check
    _
  $region3: #{fused_conv_sub_relu.1} parent=0 // pred_check_branch
    %9 = sbr.rel (0) target = $region5
  $region4: #{fused_conv_sub_relu.1} parent=0 // pred_region
    _
  $region5: #{fused_conv_sub_relu.1} parent=0 // pred_fallthru
    _
  // Predicated region
  $region6: #{fused_conv_sub_relu.1} parent=0 // pred_check
    _
  $region7: #{fused_conv_sub_relu.1} parent=0 // pred_check_branch
    %11 = sbr.rel (0) target = $region9
  $region8: #{fused_conv_sub_relu.1} parent=0 // pred_region
    _
  $region9: #{fused_conv_sub_relu.1} parent=0 // pred_fallthru
    _
  // Predicated region
  $region10: #{fused_conv_sub_relu.1} parent=0 // pred_check
    _
  $region11: #{fused_conv_sub_relu.1} parent=0 // pred_check_branch
    %13 = sbr.rel (0) target = $region13
  $region12: #{fused_conv_sub_relu.1} parent=0 // pred_region
    _
  $region13: #{fused_conv_sub_relu.1} parent=0 // pred_fallthru
    _
  %v15 = vld [vmem:[%s0] sm:$0xff]
  %v16 = vld [vmem:[%s0 + $0x8] sm:$0xff]
  %v17 = vld [vmem:[%s0 + $0x10] sm:$0xff]
  %v18 = vld [vmem:[%s0 + $0x18] sm:$0xff]
  %v19 = vld [vmem:[%s0 + $0x20] sm:$0xff]
  %v20 = vld [vmem:[%s0 + $0x28] sm:$0xff]
  %v21 = vld [vmem:[%s0 + $0x30] sm:$0xff]
  %v22 = vld [vmem:[%s0 + $0x38] sm:$0xff]
  %v23 = vpack.c.bf16 %v16, %v15
  %v24 = vpack.c.bf16 %v18, %v17
  %v25 = vpack.c.bf16 %v20, %v19
  %v26 = vpack.c.bf16 %v22, %v21
  %27 = vst [vmem:[#allocation2] sm:$0xff] %v23
  %28 = vst [vmem:[#allocation2 + $0x8] sm:$0xff] %v24
  %29 = vst [vmem:[#allocation2 + $0x10] sm:$0xff] %v25
  %30 = vst [vmem:[#allocation2 + $0x18] sm:$0xff] %v26
  %31 = vrot.lane.b32.xlu0 %v15, 127
  %v32 = vpop.permute.xlu0 %31
  %33 = vrot.lane.b32.xlu0 %v17, 127
  %v34 = vpop.permute.xlu0 %33
  %35 = vrot.lane.b32.xlu0 %v19, 127
  %v36 = vpop.permute.xlu0 %35
  %37 = vrot.lane.b32.xlu0 %v21, 127
  %v38 = vpop.permute.xlu0 %37
  %39 = vrot.lane.b32.xlu0 %v16, 127
  %v40 = vpop.permute.xlu0 %39
  %41 = vrot.lane.b32.xlu0 %v18, 127
  %v42 = vpop.permute.xlu0 %41
  %43 = vrot.lane.b32.xlu0 %v20, 127
  %v44 = vpop.permute.xlu0 %43
  %45 = vrot.lane.b32.xlu0 %v22, 127
  %v46 = vpop.permute.xlu0 %45
  %v47 = vlaneseq
  %v48 = vand.u32 %v47, 127
  %vm49 = vcmp.lt.s32.totalorder %v48, 127
  %v50 = vsel %vm49, %v32, %v40
  %v51 = vsel %vm49, %v34, %v42
  %v52 = vsel %vm49, %v36, %v44
  %v53 = vsel %vm49, %v38, %v46
  %v54 = vsel %vm49, %v40, %v32
  %v55 = vsel %vm49, %v42, %v34
  %v56 = vsel %vm49, %v44, %v36
  %v57 = vsel %vm49, %v46, %v38
  %v58 = vpack.c.bf16 %v54, %v50
  %v59 = vpack.c.bf16 %v55, %v51
  %v60 = vpack.c.bf16 %v56, %v52
  %v61 = vpack.c.bf16 %v57, %v53
  %62 = vst [vmem:[#allocation2 + $0x20] sm:$0xff] %v58
  %63 = vst [vmem:[#allocation2 + $0x28] sm:$0xff] %v59
  %64 = vst [vmem:[#allocation2 + $0x30] sm:$0xff] %v60
  %65 = vst [vmem:[#allocation2 + $0x38] sm:$0xff] %v61
  %66 = vrot.lane.b32.xlu0 %v15, 126
  %v67 = vpop.permute.xlu0 %66
  %68 = vrot.lane.b32.xlu0 %v17, 126
  %v69 = vpop.permute.xlu0 %68
  %70 = vrot.lane.b32.xlu0 %v19, 126
  %v71 = vpop.permute.xlu0 %70
  %72 = vrot.lane.b32.xlu0 %v21, 126
  %v73 = vpop.permute.xlu0 %72
  %74 = vrot.lane.b32.xlu0 %v16, 126
  %v75 = vpop.permute.xlu0 %74
  %76 = vrot.lane.b32.xlu0 %v18, 126
  %v77 = vpop.permute.xlu0 %76
  %78 = vrot.lane.b32.xlu0 %v20, 126
  %v79 = vpop.permute.xlu0 %78
  %80 = vrot.lane.b32.xlu0 %v22, 126
  %v81 = vpop.permute.xlu0 %80
  %vm82 = vcmp.lt.s32.totalorder %v48, 126
  %v83 = vsel %vm82, %v67, %v75
  %v84 = vsel %vm82, %v69, %v77
  %v85 = vsel %vm82, %v71, %v79
  %v86 = vsel %vm82, %v73, %v81
  %v87 = vsel %vm82, %v75, %v67
  %v88 = vsel %vm82, %v77, %v69
  %v89 = vsel %vm82, %v79, %v71
  %v90 = vsel %vm82, %v81, %v73
  %v91 = vpack.c.bf16 %v87, %v83
  %v92 = vpack.c.bf16 %v88, %v84
  %v93 = vpack.c.bf16 %v89, %v85
  %v94 = vpack.c.bf16 %v90, %v86
  %95 = vst [vmem:[#allocation2 + $0x40] sm:$0xff] %v91
  %96 = vst [vmem:[#allocation2 + $0x48] sm:$0xff] %v92
  %97 = vst [vmem:[#allocation2 + $0x50] sm:$0xff] %v93
  %98 = vst [vmem:[#allocation2 + $0x58] sm:$0xff] %v94
  %99 = vrot.lane.b32.xlu0 %v15, 112
  %v100 = vpop.permute.xlu0 %99
  %101 = vrot.lane.b32.xlu0 %v17, 112
  %v102 = vpop.permute.xlu0 %101
  %103 = vrot.lane.b32.xlu0 %v19, 112
  %v104 = vpop.permute.xlu0 %103
  %105 = vrot.lane.b32.xlu0 %v21, 112
  %v106 = vpop.permute.xlu0 %105
  %107 = vrot.lane.b32.xlu0 %v16, 112
  %v108 = vpop.permute.xlu0 %107
  %109 = vrot.lane.b32.xlu0 %v18, 112
  %v110 = vpop.permute.xlu0 %109
  %111 = vrot.lane.b32.xlu0 %v20, 112
  %v112 = vpop.permute.xlu0 %111
  %113 = vrot.lane.b32.xlu0 %v22, 112
  %v114 = vpop.permute.xlu0 %113
  %vm115 = vcmp.lt.s32.totalorder %v48, 112
  %v116 = vsel %vm115, %v100, %v108
  %v117 = vsel %vm115, %v102, %v110
  %v118 = vsel %vm115, %v104, %v112
  %v119 = vsel %vm115, %v106, %v114
  %v120 = vsel %vm115, %v108, %v100
  %v121 = vsel %vm115, %v110, %v102
  %v122 = vsel %vm115, %v112, %v104
  %v123 = vsel %vm115, %v114, %v106
  %v124 = vpack.c.bf16 %v120, %v116
  %v125 = vpack.c.bf16 %v121, %v117
  %v126 = vpack.c.bf16 %v122, %v118
  %v127 = vpack.c.bf16 %v123, %v119
  %128 = vst [vmem:[#allocation2 + $0x60] sm:$0xff] %v124
  %129 = vst [vmem:[#allocation2 + $0x68] sm:$0xff] %v125
  %130 = vst [vmem:[#allocation2 + $0x70] sm:$0xff] %v126
  %131 = vst [vmem:[#allocation2 + $0x78] sm:$0xff] %v127
  %132 = vrot.lane.b32.xlu0 %v15, 111
  %v133 = vpop.permute.xlu0 %132
  %134 = vrot.lane.b32.xlu0 %v17, 111
  %v135 = vpop.permute.xlu0 %134
  %136 = vrot.lane.b32.xlu0 %v19, 111
  %v137 = vpop.permute.xlu0 %136
  %138 = vrot.lane.b32.xlu0 %v21, 111
  %v139 = vpop.permute.xlu0 %138
  %140 = vrot.lane.b32.xlu0 %v16, 111
  %v141 = vpop.permute.xlu0 %140
  %142 = vrot.lane.b32.xlu0 %v18, 111
  %v143 = vpop.permute.xlu0 %142
  %144 = vrot.lane.b32.xlu0 %v20, 111
  %v145 = vpop.permute.xlu0 %144
  %146 = vrot.lane.b32.xlu0 %v22, 111
  %v147 = vpop.permute.xlu0 %146
  %vm148 = vcmp.lt.s32.totalorder %v48, 111
  %v149 = vsel %vm148, %v133, %v141
  %v150 = vsel %vm148, %v135, %v143
  %v151 = vsel %vm148, %v137, %v145
  %v152 = vsel %vm148, %v139, %v147
  %v153 = vsel %vm148, %v141, %v133
  %v154 = vsel %vm148, %v143, %v135
  %v155 = vsel %vm148, %v145, %v137
  %v156 = vsel %vm148, %v147, %v139
  %v157 = vpack.c.bf16 %v153, %v149
  %v158 = vpack.c.bf16 %v154, %v150
  %v159 = vpack.c.bf16 %v155, %v151
  %v160 = vpack.c.bf16 %v156, %v152
  %161 = vst [vmem:[#allocation2 + $0x80] sm:$0xff] %v157
  %162 = vst [vmem:[#allocation2 + $0x88] sm:$0xff] %v158
  %163 = vst [vmem:[#allocation2 + $0x90] sm:$0xff] %v159
  %164 = vst [vmem:[#allocation2 + $0x98] sm:$0xff] %v160
  %165 = vrot.lane.b32.xlu0 %v15, 110
  %v166 = vpop.permute.xlu0 %165
  %167 = vrot.lane.b32.xlu0 %v17, 110
  %v168 = vpop.permute.xlu0 %167
  %169 = vrot.lane.b32.xlu0 %v19, 110
  %v170 = vpop.permute.xlu0 %169
  %171 = vrot.lane.b32.xlu0 %v21, 110
  %v172 = vpop.permute.xlu0 %171
  %173 = vrot.lane.b32.xlu0 %v16, 110
  %v174 = vpop.permute.xlu0 %173
  %175 = vrot.lane.b32.xlu0 %v18, 110
  %v176 = vpop.permute.xlu0 %175
  %177 = vrot.lane.b32.xlu0 %v20, 110
  %v178 = vpop.permute.xlu0 %177
  %179 = vrot.lane.b32.xlu0 %v22, 110
  %v180 = vpop.permute.xlu0 %179
  %vm181 = vcmp.lt.s32.totalorder %v48, 110
  %v182 = vsel %vm181, %v166, %v174
  %v183 = vsel %vm181, %v168, %v176
  %v184 = vsel %vm181, %v170, %v178
  %v185 = vsel %vm181, %v172, %v180
  %v186 = vsel %vm181, %v174, %v166
  %v187 = vsel %vm181, %v176, %v168
  %v188 = vsel %vm181, %v178, %v170
  %v189 = vsel %vm181, %v180, %v172
  %v190 = vpack.c.bf16 %v186, %v182
  %v191 = vpack.c.bf16 %v187, %v183
  %v192 = vpack.c.bf16 %v188, %v184
  %v193 = vpack.c.bf16 %v189, %v185
  %194 = vst [vmem:[#allocation2 + $0xa0] sm:$0xff] %v190
  %195 = vst [vmem:[#allocation2 + $0xa8] sm:$0xff] %v191
  %196 = vst [vmem:[#allocation2 + $0xb0] sm:$0xff] %v192
  %197 = vst [vmem:[#allocation2 + $0xb8] sm:$0xff] %v193
  %198 = vrot.lane.b32.xlu0 %v15, 96
  %v199 = vpop.permute.xlu0 %198
  %200 = vrot.lane.b32.xlu0 %v17, 96
  %v201 = vpop.permute.xlu0 %200
  %202 = vrot.lane.b32.xlu0 %v19, 96
  %v203 = vpop.permute.xlu0 %202
  %204 = vrot.lane.b32.xlu0 %v21, 96
  %v205 = vpop.permute.xlu0 %204
  %206 = vrot.lane.b32.xlu0 %v16, 96
  %v207 = vpop.permute.xlu0 %206
  %208 = vrot.lane.b32.xlu0 %v18, 96
  %v209 = vpop.permute.xlu0 %208
  %210 = vrot.lane.b32.xlu0 %v20, 96
  %v211 = vpop.permute.xlu0 %210
  %212 = vrot.lane.b32.xlu0 %v22, 96
  %v213 = vpop.permute.xlu0 %212
  %vm214 = vcmp.lt.s32.totalorder %v48, 96
  %v215 = vsel %vm214, %v199, %v207
  %v216 = vsel %vm214, %v201, %v209
  %v217 = vsel %vm214, %v203, %v211
  %v218 = vsel %vm214, %v205, %v213
  %v219 = vsel %vm214, %v207, %v199
  %v220 = vsel %vm214, %v209, %v201
  %v221 = vsel %vm214, %v211, %v203
  %v222 = vsel %vm214, %v213, %v205
  %v223 = vpack.c.bf16 %v219, %v215
  %v224 = vpack.c.bf16 %v220, %v216
  %v225 = vpack.c.bf16 %v221, %v217
  %v226 = vpack.c.bf16 %v222, %v218
  %227 = vst [vmem:[#allocation2 + $0xc0] sm:$0xff] %v223
  %228 = vst [vmem:[#allocation2 + $0xc8] sm:$0xff] %v224
  %229 = vst [vmem:[#allocation2 + $0xd0] sm:$0xff] %v225
  %230 = vst [vmem:[#allocation2 + $0xd8] sm:$0xff] %v226
  %231 = vrot.lane.b32.xlu0 %v15, 95
  %v232 = vpop.permute.xlu0 %231
  %233 = vrot.lane.b32.xlu0 %v17, 95
  %v234 = vpop.permute.xlu0 %233
  %235 = vrot.lane.b32.xlu0 %v19, 95
  %v236 = vpop.permute.xlu0 %235
  %237 = vrot.lane.b32.xlu0 %v21, 95
  %v238 = vpop.permute.xlu0 %237
  %239 = vrot.lane.b32.xlu0 %v16, 95
  %v240 = vpop.permute.xlu0 %239
  %241 = vrot.lane.b32.xlu0 %v18, 95
  %v242 = vpop.permute.xlu0 %241
  %243 = vrot.lane.b32.xlu0 %v20, 95
  %v244 = vpop.permute.xlu0 %243
  %245 = vrot.lane.b32.xlu0 %v22, 95
  %v246 = vpop.permute.xlu0 %245
  %vm247 = vcmp.lt.s32.totalorder %v48, 95
  %v248 = vsel %vm247, %v232, %v240
  %v249 = vsel %vm247, %v234, %v242
  %v250 = vsel %vm247, %v236, %v244
  %v251 = vsel %vm247, %v238, %v246
  %v252 = vsel %vm247, %v240, %v232
  %v253 = vsel %vm247, %v242, %v234
  %v254 = vsel %vm247, %v244, %v236
  %v255 = vsel %vm247, %v246, %v238
  %v256 = vpack.c.bf16 %v252, %v248
  %v257 = vpack.c.bf16 %v253, %v249
  %v258 = vpack.c.bf16 %v254, %v250
  %v259 = vpack.c.bf16 %v255, %v251
  %260 = vst [vmem:[#allocation2 + $0xe0] sm:$0xff] %v256
  %261 = vst [vmem:[#allocation2 + $0xe8] sm:$0xff] %v257
  %262 = vst [vmem:[#allocation2 + $0xf0] sm:$0xff] %v258
  %263 = vst [vmem:[#allocation2 + $0xf8] sm:$0xff] %v259
  %264 = vrot.lane.b32.xlu0 %v15, 94
  %v265 = vpop.permute.xlu0 %264
  %266 = vrot.lane.b32.xlu0 %v17, 94
  %v267 = vpop.permute.xlu0 %266
  %268 = vrot.lane.b32.xlu0 %v19, 94
  %v269 = vpop.permute.xlu0 %268
  %270 = vrot.lane.b32.xlu0 %v21, 94
  %v271 = vpop.permute.xlu0 %270
  %272 = vrot.lane.b32.xlu0 %v16, 94
  %v273 = vpop.permute.xlu0 %272
  %274 = vrot.lane.b32.xlu0 %v18, 94
  %v275 = vpop.permute.xlu0 %274
  %276 = vrot.lane.b32.xlu0 %v20, 94
  %v277 = vpop.permute.xlu0 %276
  %278 = vrot.lane.b32.xlu0 %v22, 94
  %v279 = vpop.permute.xlu0 %278
  %vm280 = vcmp.lt.s32.totalorder %v48, 94
  %v281 = vsel %vm280, %v265, %v273
  %v282 = vsel %vm280, %v267, %v275
  %v283 = vsel %vm280, %v269, %v277
  %v284 = vsel %vm280, %v271, %v279
  %v285 = vsel %vm280, %v273, %v265
  %v286 = vsel %vm280, %v275, %v267
  %v287 = vsel %vm280, %v277, %v269
  %v288 = vsel %vm280, %v279, %v271
  %v289 = vpack.c.bf16 %v285, %v281
  %v290 = vpack.c.bf16 %v286, %v282
  %v291 = vpack.c.bf16 %v287, %v283
  %v292 = vpack.c.bf16 %v288, %v284
  %293 = vst [vmem:[#allocation2 + $0x100] sm:$0xff] %v289
  %294 = vst [vmem:[#allocation2 + $0x108] sm:$0xff] %v290
  %295 = vst [vmem:[#allocation2 + $0x110] sm:$0xff] %v291
  %296 = vst [vmem:[#allocation2 + $0x118] sm:$0xff] %v292
  %v297 = vld [vmem:[%s1] sm:$0xff]
  %v298 = vld [vmem:[%s1 + $0x8] sm:$0xf]
  %v299 = vld [vmem:[%s1 + $0xc] sm:$0xff]
  %v300 = vld [vmem:[%s1 + $0x14] sm:$0xf]
  %v301 = vld [vmem:[%s1 + $0x18] sm:$0xff]
  %v302 = vld [vmem:[%s1 + $0x20] sm:$0xf]
  %v303 = vld [vmem:[%s1 + $0x24] sm:$0xff]
  %v304 = vld [vmem:[%s1 + $0x2c] sm:$0xf]
  %v305 = vld [vmem:[#allocation2] sm:$0xff]
  %v306 = vld [vmem:[#allocation2 + $0x8] sm:$0xff]
  %v307 = vld [vmem:[#allocation2 + $0x10] sm:$0xff]
  %v308 = vld [vmem:[#allocation2 + $0x18] sm:$0xff]
  %v309 = vld [vmem:[#allocation2 + $0x20] sm:$0xff]
  %v310 = vld [vmem:[#allocation2 + $0x28] sm:$0xff]
  %v311 = vld [vmem:[#allocation2 + $0x30] sm:$0xff]
  %v312 = vld [vmem:[#allocation2 + $0x38] sm:$0xff]
  %v313 = vld [vmem:[#allocation2 + $0x40] sm:$0xff]
  %v314 = vld [vmem:[#allocation2 + $0x48] sm:$0xff]
  %v315 = vld [vmem:[#allocation2 + $0x50] sm:$0xff]
  %v316 = vld [vmem:[#allocation2 + $0x58] sm:$0xff]
  %v317 = vld [vmem:[#allocation2 + $0x60] sm:$0xff]
  %v318 = vld [vmem:[#allocation2 + $0x68] sm:$0xff]
  %v319 = vld [vmem:[#allocation2 + $0x70] sm:$0xff]
  %v320 = vld [vmem:[#allocation2 + $0x78] sm:$0xff]
  %v321 = vld [vmem:[#allocation2 + $0x80] sm:$0xff]
  %v322 = vld [vmem:[#allocation2 + $0x88] sm:$0xff]
  %v323 = vld [vmem:[#allocation2 + $0x90] sm:$0xff]
  %v324 = vld [vmem:[#allocation2 + $0x98] sm:$0xff]
  %v325 = vld [vmem:[#allocation2 + $0xa0] sm:$0xff]
  %v326 = vld [vmem:[#allocation2 + $0xa8] sm:$0xff]
  %v327 = vld [vmem:[#allocation2 + $0xb0] sm:$0xff]
  %v328 = vld [vmem:[#allocation2 + $0xb8] sm:$0xff]
  %v329 = vld [vmem:[#allocation2 + $0xc0] sm:$0xff]
  %v330 = vld [vmem:[#allocation2 + $0xc8] sm:$0xff]
  %v331 = vld [vmem:[#allocation2 + $0xd0] sm:$0xff]
  %v332 = vld [vmem:[#allocation2 + $0xd8] sm:$0xff]
  %v333 = vld [vmem:[#allocation2 + $0xe0] sm:$0xff]
  %v334 = vld [vmem:[#allocation2 + $0xe8] sm:$0xff]
  %v335 = vld [vmem:[#allocation2 + $0xf0] sm:$0xff]
  %v336 = vld [vmem:[#allocation2 + $0xf8] sm:$0xff]
  %v337 = vld [vmem:[#allocation2 + $0x100] sm:$0xff]
  %v338 = vld [vmem:[#allocation2 + $0x108] sm:$0xff]
  %v339 = vld [vmem:[#allocation2 + $0x110] sm:$0xff]
  %v340 = vld [vmem:[#allocation2 + $0x118] sm:$0xff]
  %v341 = vld [vmem:[%s2] sm:$0xff]
  %v342 = vld [vmem:[%s2 + $0x8] sm:$0xff]
  %v343 = vld [vmem:[%s2 + $0x10] sm:$0xff]
  %v344 = vld [vmem:[%s2 + $0x18] sm:$0xff]
  %346 = vset.pattern.permute.xlu0 0
  %347 = vperm.xlu0 %346, %v341
  %v348 = vpop.permute.xlu0 %347
  %351 = vset.pattern.permute.xlu0 0
  %352 = vperm.xlu0 %351, %v342
  %v353 = vpop.permute.xlu0 %352
  %356 = vset.pattern.permute.xlu0 0
  %357 = vperm.xlu0 %356, %v343
  %v358 = vpop.permute.xlu0 %357
  %361 = vset.pattern.permute.xlu0 0
  %362 = vperm.xlu0 %361, %v344
  %v363 = vpop.permute.xlu0 %362
  %v373 = vunpack.c.l.b16 %v297
  %v374 = vunpack.c.h.b16 %v297
  %v375 = vunpack.c.l.b16 %v298
  %v376 = vunpack.c.l.b16 %v299
  %v377 = vunpack.c.h.b16 %v299
  %v378 = vunpack.c.l.b16 %v300
  %v379 = vunpack.c.l.b16 %v301
  %v380 = vunpack.c.h.b16 %v301
  %v381 = vunpack.c.l.b16 %v302
  %v382 = vunpack.c.l.b16 %v303
  %v383 = vunpack.c.h.b16 %v303
  %v384 = vunpack.c.l.b16 %v304
  %v385 = vpack.c.b16 %v376, %v373
  %v386 = vpack.c.b16 %v377, %v374
  %v387 = vpack.c.b16 %v378, %v375
  %v388 = vpack.c.b16 %v382, %v379
  %v389 = vpack.c.b16 %v383, %v380
  %v390 = vpack.c.b16 %v384, %v381
  %v431 = vunpack.c.l.b16 %v305
  %v432 = vunpack.c.h.b16 %v305
  %v433 = vunpack.c.l.b16 %v306
  %v434 = vunpack.c.h.b16 %v306
  %v435 = vunpack.c.l.b16 %v307
  %v436 = vunpack.c.h.b16 %v307
  %v437 = vunpack.c.l.b16 %v308
  %v438 = vunpack.c.h.b16 %v308
  %v439 = vunpack.c.l.b16 %v309
  %v440 = vunpack.c.h.b16 %v309
  %v441 = vunpack.c.l.b16 %v310
  %v442 = vunpack.c.h.b16 %v310
  %v443 = vunpack.c.l.b16 %v311
  %v444 = vunpack.c.h.b16 %v311
  %v445 = vunpack.c.l.b16 %v312
  %v446 = vunpack.c.h.b16 %v312
  %v447 = vunpack.c.l.b16 %v313
  %v448 = vunpack.c.h.b16 %v313
  %v449 = vunpack.c.l.b16 %v314
  %v450 = vunpack.c.h.b16 %v314
  %v451 = vunpack.c.l.b16 %v315
  %v452 = vunpack.c.h.b16 %v315
  %v453 = vunpack.c.l.b16 %v316
  %v454 = vunpack.c.h.b16 %v316
  %v455 = vunpack.c.l.b16 %v317
  %v456 = vunpack.c.h.b16 %v317
  %v457 = vunpack.c.l.b16 %v318
  %v458 = vunpack.c.h.b16 %v318
  %v459 = vunpack.c.l.b16 %v319
  %v460 = vunpack.c.h.b16 %v319
  %v461 = vunpack.c.l.b16 %v320
  %v462 = vunpack.c.h.b16 %v320
  %v463 = vunpack.c.l.b16 %v321
  %v464 = vunpack.c.h.b16 %v321
  %v465 = vunpack.c.l.b16 %v322
  %v466 = vunpack.c.h.b16 %v322
  %v467 = vunpack.c.l.b16 %v323
  %v468 = vunpack.c.h.b16 %v323
  %v469 = vunpack.c.l.b16 %v324
  %v470 = vunpack.c.h.b16 %v324
  %v471 = vunpack.c.l.b16 %v325
  %v472 = vunpack.c.h.b16 %v325
  %v473 = vunpack.c.l.b16 %v326
  %v474 = vunpack.c.h.b16 %v326
  %v475 = vunpack.c.l.b16 %v327
  %v476 = vunpack.c.h.b16 %v327
  %v477 = vunpack.c.l.b16 %v328
  %v478 = vunpack.c.h.b16 %v328
  %v479 = vunpack.c.l.b16 %v329
  %v480 = vunpack.c.h.b16 %v329
  %v481 = vunpack.c.l.b16 %v330
  %v482 = vunpack.c.h.b16 %v330
  %v483 = vunpack.c.l.b16 %v331
  %v484 = vunpack.c.h.b16 %v331
  %v485 = vunpack.c.l.b16 %v332
  %v486 = vunpack.c.h.b16 %v332
  %v487 = vunpack.c.l.b16 %v333
  %v488 = vunpack.c.h.b16 %v333
  %v489 = vunpack.c.l.b16 %v334
  %v490 = vunpack.c.h.b16 %v334
  %v491 = vunpack.c.l.b16 %v335
  %v492 = vunpack.c.h.b16 %v335
  %v493 = vunpack.c.l.b16 %v336
  %v494 = vunpack.c.h.b16 %v336
  %v495 = vunpack.c.l.b16 %v337
  %v496 = vunpack.c.h.b16 %v337
  %v497 = vunpack.c.l.b16 %v338
  %v498 = vunpack.c.h.b16 %v338
  %v499 = vunpack.c.l.b16 %v339
  %v500 = vunpack.c.h.b16 %v339
  %v501 = vunpack.c.l.b16 %v340
  %v502 = vunpack.c.h.b16 %v340
  %v503 = vpack.c.b16 %v433, %v431
  %v504 = vpack.c.b16 %v434, %v432
  %v505 = vpack.c.b16 %v437, %v435
  %v506 = vpack.c.b16 %v438, %v436
  %v507 = vpack.c.b16 %v441, %v439
  %v508 = vpack.c.b16 %v442, %v440
  %v509 = vpack.c.b16 %v445, %v443
  %v510 = vpack.c.b16 %v446, %v444
  %v511 = vpack.c.b16 %v449, %v447
  %v512 = vpack.c.b16 %v450, %v448
  %v513 = vpack.c.b16 %v453, %v451
  %v514 = vpack.c.b16 %v454, %v452
  %v515 = vpack.c.b16 %v457, %v455
  %v516 = vpack.c.b16 %v458, %v456
  %v517 = vpack.c.b16 %v461, %v459
  %v518 = vpack.c.b16 %v462, %v460
  %v519 = vpack.c.b16 %v465, %v463
  %v520 = vpack.c.b16 %v466, %v464
  %v521 = vpack.c.b16 %v469, %v467
  %v522 = vpack.c.b16 %v470, %v468
  %v523 = vpack.c.b16 %v473, %v471
  %v524 = vpack.c.b16 %v474, %v472
  %v525 = vpack.c.b16 %v477, %v475
  %v526 = vpack.c.b16 %v478, %v476
  %v527 = vpack.c.b16 %v481, %v479
  %v528 = vpack.c.b16 %v482, %v480
  %v529 = vpack.c.b16 %v485, %v483
  %v530 = vpack.c.b16 %v486, %v484
  %v531 = vpack.c.b16 %v489, %v487
  %v532 = vpack.c.b16 %v490, %v488
  %v533 = vpack.c.b16 %v493, %v491
  %v534 = vpack.c.b16 %v494, %v492
  %v535 = vpack.c.b16 %v497, %v495
  %v536 = vpack.c.b16 %v498, %v496
  %v537 = vpack.c.b16 %v501, %v499
  %v538 = vpack.c.b16 %v502, %v500
  %vm575 = vcmask 261120
  %v577 = vsel %vm575, %v387, 0
  %v580 = vsel %vm575, %v390, 0
  %582 = vmatpush.bf16.msra.mxu0 %v517
  %583 = vmatpush.bf16.msra.mxu0 %v515
  %584 = vmatpush.bf16.msra.mxu0 %v513
  %585 = vmatpush.bf16.msra.mxu0 %v511
  %586 = vmatpush.bf16.msra.mxu0 %v509
  %587 = vmatpush.bf16.msra.mxu0 %v507
  %588 = vmatpush.bf16.msra.mxu0 %v505
  %589 = vmatpush.bf16.msra.mxu0 %v503
  %590 = vmatmul.bf16.gmra.mxu0 %v385
  %v591 = vpop.f32.mrf.mxu0
  %v592 = vadd.f32 %v348, %v591
  %v593 = vpop.f32.mrf.mxu0
  %v594 = vadd.f32 %v353, %v593
  %595 = vmatmul.bf16.gmra.mxu0 %v388
  %v596 = vpop.f32.mrf.mxu0
  %v597 = vadd.f32 %v358, %v596
  %v598 = vpop.f32.mrf.mxu0
  %v599 = vadd.f32 %v363, %v598
  %600 = vdwg.mxu0
  %601 = vmatpush.bf16.msra.mxu0 %v533
  %602 = vmatpush.bf16.msra.mxu0 %v531
  %603 = vmatpush.bf16.msra.mxu0 %v529
  %604 = vmatpush.bf16.msra.mxu0 %v527
  %605 = vmatpush.bf16.msra.mxu0 %v525
  %606 = vmatpush.bf16.msra.mxu0 %v523
  %607 = vmatpush.bf16.msra.mxu0 %v521
  %608 = vmatpush.bf16.msra.mxu0 %v519
  %609 = vmatmul.bf16.gmra.mxu0 %v386
  %v610 = vpop.f32.mrf.mxu0
  %v611 = vadd.f32 %v592, %v610
  %v612 = vpop.f32.mrf.mxu0
  %v613 = vadd.f32 %v594, %v612
  %614 = vmatmul.bf16.gmra.mxu0 %v389
  %v615 = vpop.f32.mrf.mxu0
  %v616 = vadd.f32 %v597, %v615
  %v617 = vpop.f32.mrf.mxu0
  %v618 = vadd.f32 %v599, %v617
  %619 = vdwg.mxu0
  %620 = vmatpush.bf16.msra.mxu0 0
  %621 = vmatpush.bf16.msra.mxu0 0
  %622 = vmatpush.bf16.msra.mxu0 0
  %623 = vmatpush.bf16.msra.mxu0 0
  %624 = vmatpush.bf16.msra.mxu0 0
  %625 = vmatpush.bf16.msra.mxu0 0
  %626 = vmatpush.bf16.msra.mxu0 %v537
  %627 = vmatpush.bf16.msra.mxu0 %v535
  %628 = vmatmul.bf16.gmra.mxu0 %v577
  %v629 = vpop.f32.mrf.mxu0
  %v630 = vadd.f32 %v611, %v629
  %v631 = vpop.f32.mrf.mxu0
  %v632 = vadd.f32 %v613, %v631
  %633 = vmatmul.bf16.gmra.mxu0 %v580
  %v634 = vpop.f32.mrf.mxu0
  %v635 = vadd.f32 %v616, %v634
  %v636 = vpop.f32.mrf.mxu0
  %v637 = vadd.f32 %v618, %v636
  %638 = vdwg.mxu0
  %639 = vmatpush.bf16.msra.mxu0 %v518
  %640 = vmatpush.bf16.msra.mxu0 %v516
  %641 = vmatpush.bf16.msra.mxu0 %v514
  %642 = vmatpush.bf16.msra.mxu0 %v512
  %643 = vmatpush.bf16.msra.mxu0 %v510
  %644 = vmatpush.bf16.msra.mxu0 %v508
  %645 = vmatpush.bf16.msra.mxu0 %v506
  %646 = vmatpush.bf16.msra.mxu0 %v504
  %647 = vmatmul.bf16.gmra.mxu0 %v385
  %v648 = vpop.f32.mrf.mxu0
  %v649 = vadd.f32 %v348, %v648
  %v650 = vpop.f32.mrf.mxu0
  %v651 = vadd.f32 %v353, %v650
  %652 = vmatmul.bf16.gmra.mxu0 %v388
  %v653 = vpop.f32.mrf.mxu0
  %v654 = vadd.f32 %v358, %v653
  %v655 = vpop.f32.mrf.mxu0
  %v656 = vadd.f32 %v363, %v655
  %657 = vdwg.mxu0
  %658 = vmatpush.bf16.msra.mxu0 %v534
  %659 = vmatpush.bf16.msra.mxu0 %v532
  %660 = vmatpush.bf16.msra.mxu0 %v530
  %661 = vmatpush.bf16.msra.mxu0 %v528
  %662 = vmatpush.bf16.msra.mxu0 %v526
  %663 = vmatpush.bf16.msra.mxu0 %v524
  %664 = vmatpush.bf16.msra.mxu0 %v522
  %665 = vmatpush.bf16.msra.mxu0 %v520
  %666 = vmatmul.bf16.gmra.mxu0 %v386
  %v667 = vpop.f32.mrf.mxu0
  %v668 = vadd.f32 %v649, %v667
  %v669 = vpop.f32.mrf.mxu0
  %v670 = vadd.f32 %v651, %v669
  %671 = vmatmul.bf16.gmra.mxu0 %v389
  %v672 = vpop.f32.mrf.mxu0
  %v673 = vadd.f32 %v654, %v672
  %v674 = vpop.f32.mrf.mxu0
  %v675 = vadd.f32 %v656, %v674
  %676 = vdwg.mxu0
  %677 = vmatpush.bf16.msra.mxu0 0
  %678 = vmatpush.bf16.msra.mxu0 0
  %679 = vmatpush.bf16.msra.mxu0 0
  %680 = vmatpush.bf16.msra.mxu0 0
  %681 = vmatpush.bf16.msra.mxu0 0
  %682 = vmatpush.bf16.msra.mxu0 0
  %683 = vmatpush.bf16.msra.mxu0 %v538
  %684 = vmatpush.bf16.msra.mxu0 %v536
  %685 = vmatmul.bf16.gmra.mxu0 %v577
  %v686 = vpop.f32.mrf.mxu0
  %v687 = vadd.f32 %v668, %v686
  %v688 = vpop.f32.mrf.mxu0
  %v689 = vadd.f32 %v670, %v688
  %690 = vmatmul.bf16.gmra.mxu0 %v580
  %v691 = vpop.f32.mrf.mxu0
  %v692 = vadd.f32 %v673, %v691
  %v693 = vpop.f32.mrf.mxu0
  %v694 = vadd.f32 %v675, %v693
  %695 = vdwg.mxu0
  %v696 = vmax.f32 %v630, 0.0
  %v697 = vmax.f32 %v687, 0.0
  %v698 = vmax.f32 %v632, 0.0
  %v699 = vmax.f32 %v689, 0.0
  %v700 = vmax.f32 %v635, 0.0
  %v701 = vmax.f32 %v692, 0.0
  %v702 = vmax.f32 %v637, 0.0
  %v703 = vmax.f32 %v694, 0.0
  %704 = vst [vmem:[%s3] sm:$0xff] %v696
  %705 = vst [vmem:[%s3 + $0x8] sm:$0xff] %v697
  %706 = vst [vmem:[%s3 + $0x10] sm:$0xff] %v698
  %707 = vst [vmem:[%s3 + $0x18] sm:$0xff] %v699
  %708 = vst [vmem:[%s3 + $0x20] sm:$0xff] %v700
  %709 = vst [vmem:[%s3 + $0x28] sm:$0xff] %v701
  %710 = vst [vmem:[%s3 + $0x30] sm:$0xff] %v702
  %711 = vst [vmem:[%s3 + $0x38] sm:$0xff] %v703
  // Predicated region
  $region14: #{fused_conv_sub_relu.1} parent=0 // pred_check
    _
  $region15: #{fused_conv_sub_relu.1} parent=0 // pred_check_branch
    %713 = sbr.rel (0) target = $region17
  $region16: #{fused_conv_sub_relu.1} parent=0 // pred_region
    _
  $region17: #{fused_conv_sub_relu.1} parent=0 // pred_fallthru
    _
  // Predicated region
  $region18: #{fused_conv_sub_relu.1} parent=0 // pred_check
    _
  $region19: #{fused_conv_sub_relu.1} parent=0 // pred_check_branch
    %715 = sbr.rel (0) target = $region21
  $region20: #{fused_conv_sub_relu.1} parent=0 // pred_region
    _
  $region21: #{fused_conv_sub_relu.1} parent=0 // pred_fallthru
    _

</llo_original>
